<compile_context>
chip_gen: v5e
topology: v5e:2x2
jax: 0.10.0
libtpu: 0.0.40
codegen_flags: <defaults>
</compile_context>

<pallas_src>
import functools

import jax
import jax.numpy as jnp
from jax.experimental import pallas as pl
from jax.experimental.pallas import tpu as pltpu


def policy_kernel(x_ref, w_ref, b_ref, o_ref, *, d_out):
    # x_ref: (TM, D_in)  w_ref: (D_in, D_pad)  b_ref: (1, D_pad)  o_ref: (TM, d_out)
    logits = (
        jnp.dot(x_ref[...], w_ref[...], preferred_element_type=jnp.float32)
        + b_ref[...]
    )
    # Numerically stable softmax along the lane axis.  Padded lanes carry a
    # -1e30 bias, so exp(logits - m) == 0 there and they never perturb the sum.
    m = jnp.max(logits, axis=-1, keepdims=True)
    e = jnp.exp(logits - m)
    denom = jnp.sum(e, axis=-1, keepdims=True)
    # Exact normalization (approx reciprocal caused row sums to drift from 1).
    # Store only the real classes -> natural-width output, no padded lanes hit HBM.
    o_ref[...] = (e[:, :d_out] / denom).astype(o_ref.dtype)


def prepare_params(w_t, b):
    """One-time (init/load-time) padding of Linear params to 128 lanes.

    w_t: (D_in, D_out) == torch weight transposed; b: (D_out,).
    Returns (w_pad (D_in, d_pad), b_pad (1, d_pad), d_out).
    """
    d_in, d_out = w_t.shape
    d_pad = ((d_out + 127) // 128) * 128
    w_pad = jnp.zeros((d_in, d_pad), jnp.float32).at[:, :d_out].set(
        w_t.astype(jnp.float32)
    )
    # Padded lanes get a very negative bias so they contribute exp(...) == 0.
    b_pad = jnp.full((1, d_pad), -1e30, jnp.float32).at[0, :d_out].set(
        b.astype(jnp.float32)
    )
    return w_pad, b_pad, d_out


def _pick_block_rows(batch):
    # Grow the tile with the batch (less per-grid-step overhead), cap at 1024
    # rows, and keep >= 2 grid steps when possible so v7x's two TensorCores
    # both get work under dimension_semantics=("parallel",).
    tm = max(8, min(1024, -(-batch // 2)))  # cdiv(batch, 2), at least 8
    return ((tm + 7) // 8) * 8              # sublane-aligned


def policy_network(x, w_pad, b_pad, d_out, *, block_rows=None):
    """x: (B, D_in) f32; w_pad/b_pad from prepare_params -> (B, d_out) softmax probs."""
    B, D_in = x.shape
    d_pad = w_pad.shape[1]

    tm = block_rows if block_rows is not None else _pick_block_rows(B)
    b_padded = ((B + tm - 1) // tm) * tm

    x_p = x.astype(jnp.float32)
    if b_padded != B:  # only pad when needed (skips an XLA op in the common case)
        x_p = jnp.pad(x_p, ((0, b_padded - B), (0, 0)))

    grid = (b_padded // tm,)

    cost = pl.CostEstimate(
        flops=2 * b_padded * D_in * d_pad,
        transcendentals=b_padded * d_pad,
        bytes_accessed=4 * (b_padded * D_in + b_padded * d_out + D_in * d_pad + d_pad),
    )

    out = pl.pallas_call(
        functools.partial(policy_kernel, d_out=d_out),
        out_shape=jax.ShapeDtypeStruct((b_padded, d_out), jnp.float32),
        grid_spec=pltpu.PrefetchScalarGridSpec(
            num_scalar_prefetch=0,
            grid=grid,
            in_specs=[
                # x tile marches down the batch with the grid.
                pl.BlockSpec((tm, D_in), lambda i: (i, 0)),
                # Weight and bias stay VMEM-resident across all grid steps.
                pl.BlockSpec((D_in, d_pad), lambda i: (0, 0)),
                pl.BlockSpec((1, d_pad), lambda i: (0, 0)),
            ],
            # Natural-width output block: last dim == full array dim (d_out).
            out_specs=pl.BlockSpec((tm, d_out), lambda i: (i, 0)),
        ),
        compiler_params=pltpu.CompilerParams(
            # Batch tiles are independent -> shard across TCs on v7x; harmless
            # on v5e/v6e.
            dimension_semantics=("parallel",),
            vmem_limit_bytes=32 * 1024 * 1024,
        ),
        cost_estimate=cost,
    )(x_p, w_pad, b_pad)

    # Strip batch padding only if it was added (class axis already natural width).
    if b_padded != B:
        out = out[:B]
    return out


if __name__ == "__main__":
    # Batched shapes consistent with the module's forward; B=256 gives a
    # 2-step grid at tm=128 (keeps both v7x TensorCores busy).
    B, input_dim, output_dim = 256, 32, 16

    key = jax.random.PRNGKey(0)
    kx, kw, kb = jax.random.split(key, 3)

    # Deterministic init mimicking nn.Linear's uniform(-1/sqrt(fan_in), ...).
    bound = 1.0 / jnp.sqrt(jnp.float32(input_dim))
    # Weight stored pre-transposed: (input_dim, output_dim) == W.T from torch (out, in).
    w_t = jax.random.uniform(kw, (input_dim, output_dim), jnp.float32, -bound, bound)
    b = jax.random.uniform(kb, (output_dim,), jnp.float32, -bound, bound)

    x = jax.random.normal(kx, (B, input_dim), jnp.float32)

    # Hoisted, one-time parameter padding (not part of the per-forward path).
    w_pad, b_pad, d_out = prepare_params(w_t, b)

    probs = policy_network(x, w_pad, b_pad, d_out)
    probs = jax.block_until_ready(probs)

    # Sanity check against plain-JAX reference (exact divide -> tight tolerance).
    ref = jax.nn.softmax(x @ w_t + b, axis=-1)
    assert probs.shape == (B, output_dim)
    assert jnp.allclose(probs, ref, atol=1e-5, rtol=1e-5)
    assert jnp.allclose(jnp.sum(probs, axis=-1), 1.0, atol=1e-5)

    print("KERNEL_OK")
</pallas_src>

<mosaic_0001>
module attributes {stable_mosaic.version = 11 : i64} {
  func.func @policy_kernel(%arg0: i32, %arg1: memref<128x32xf32, #tpu.memory_space<vmem>>, %arg2: memref<32x128xf32, #tpu.memory_space<vmem>>, %arg3: memref<1x128xf32, #tpu.memory_space<vmem>>, %arg4: memref<128x16xf32, #tpu.memory_space<vmem>>) attributes {dimension_semantics = [#tpu.dimension_semantics<parallel>], iteration_bounds = array<i64: 2>, scalar_prefetch = 0 : i64, scratch_operands = 0 : i64, tpu.core_type = #tpu.core_type<tc>, window_params = [{transform_indices = @transform_0, window_bounds = array<i64: 128, 32>}, {pipeline_mode = #tpu.pipeline_mode<synchronous>, transform_indices = @transform_1, window_bounds = array<i64: 32, 128>}, {pipeline_mode = #tpu.pipeline_mode<synchronous>, transform_indices = @transform_2, window_bounds = array<i64: 1, 128>}, {transform_indices = @transform_3, window_bounds = array<i64: 128, 16>}]} {
    %c0 = arith.constant 0 : index
    %c0_0 = arith.constant 0 : index
    %0 = vector.load %arg1[%c0, %c0_0] : memref<128x32xf32, #tpu.memory_space<vmem>>, vector<128x32xf32>
    %c0_1 = arith.constant 0 : index
    %c0_2 = arith.constant 0 : index
    %1 = vector.load %arg2[%c0_1, %c0_2] : memref<32x128xf32, #tpu.memory_space<vmem>>, vector<32x128xf32>
    %cst = arith.constant dense<0.000000e+00> : vector<128x128xf32>
    %2 = tpu.matmul %0, %1, %cst {dimension_numbers = #tpu.dot_dimension_numbers<[1], [0], [0], [1], [0, 0, 1, 1], [], []>} : vector<128x32xf32>, vector<32x128xf32>, vector<128x128xf32> -> vector<128x128xf32>
    %c0_3 = arith.constant 0 : index
    %c0_4 = arith.constant 0 : index
    %3 = vector.load %arg3[%c0_3, %c0_4] : memref<1x128xf32, #tpu.memory_space<vmem>>, vector<1x128xf32>
    %4 = vector.broadcast %3 : vector<1x128xf32> to vector<128x128xf32>
    %5 = arith.addf %2, %4 : vector<128x128xf32>
    %cst_5 = arith.constant dense<0xFF800000> : vector<128xf32>
    %6 = vector.multi_reduction <maximumf>, %5, %cst_5 [1] : vector<128x128xf32> to vector<128xf32>
    %7 = vector.shape_cast %6 : vector<128xf32> to vector<128x1xf32>
    %8 = vector.broadcast %7 : vector<128x1xf32> to vector<128x128xf32>
    %9 = arith.subf %5, %8 : vector<128x128xf32>
    %10 = math.exp %9 : vector<128x128xf32>
    %cst_6 = arith.constant dense<0.000000e+00> : vector<128xf32>
    %11 = vector.multi_reduction <add>, %10, %cst_6 [1] : vector<128x128xf32> to vector<128xf32>
    %12 = vector.shape_cast %11 : vector<128xf32> to vector<128x1xf32>
    %13 = vector.extract_strided_slice %10 {offsets = [0, 0], sizes = [128, 16], strides = [1, 1]} : vector<128x128xf32> to vector<128x16xf32>
    %14 = vector.broadcast %12 : vector<128x1xf32> to vector<128x16xf32>
    %15 = arith.divf %13, %14 : vector<128x16xf32>
    %c0_7 = arith.constant 0 : index
    %c0_8 = arith.constant 0 : index
    %16 = vector.load %arg4[%c0_7, %c0_8] : memref<128x16xf32, #tpu.memory_space<vmem>>, vector<128x16xf32>
    tpu.vector_store %arg4[%c0_7, %c0_8], %15 {strides = array<i32>} : memref<128x16xf32, #tpu.memory_space<vmem>>, vector<128x16xf32>,
    return
  }
  func.func @transform_0(%arg0: i32) -> (i32, i32) {
    %c0_i32 = arith.constant 0 : i32
    %c0_i32_0 = arith.constant 0 : i32
    return %arg0, %c0_i32 : i32, i32
  }
  func.func @transform_1(%arg0: i32) -> (i32, i32) {
    %c0_i32 = arith.constant 0 : i32
    %c0_i32_0 = arith.constant 0 : i32
    %c0_i32_1 = arith.constant 0 : i32
    return %c0_i32, %c0_i32_0 : i32, i32
  }
  func.func @transform_2(%arg0: i32) -> (i32, i32) {
    %c0_i32 = arith.constant 0 : i32
    %c0_i32_0 = arith.constant 0 : i32
    %c0_i32_1 = arith.constant 0 : i32
    return %c0_i32, %c0_i32_0 : i32, i32
  }
  func.func @transform_3(%arg0: i32) -> (i32, i32) {
    %c0_i32 = arith.constant 0 : i32
    %c0_i32_0 = arith.constant 0 : i32
    return %arg0, %c0_i32 : i32, i32
  }
}

</mosaic_0001>

<llo_original>
// kernel: tpu_custom_call.1
$region0: #{tpu_custom_call.1}
  #allocation0 [shape = 'u32[]', space=smem, size = 0x4, offset = 0x4, fixed_abs, tag = 'smem constant byte address 0x4 - core index']
  #allocation1 [shape = 'u32[72,128]{1,0:T(1,128)}', space=vmem, size = 0x9000, scoped, tag = 'internal scratch']
  %s0 = inlined_call_operand.vmem [shape: f32[256,32], index: 0, kind: input, shape index: {}]
  %s1 = inlined_call_operand.vmem [shape: f32[32,128], index: 1, kind: input, shape index: {}]
  %s2 = inlined_call_operand.vmem [shape: f32[1,128], index: 2, kind: input, shape index: {}]
  %s3 = inlined_call_operand.vmem [shape: f32[256,16], index: 3, kind: output, shape index: {}]
  %s4 = sld [smem:[#allocation0]]
  $region45: #{tpu_custom_call.1} parent=0
    _
  %s6 = ssub.s32 1, %s4
  %s7 = scalar_select 0, %s6, %s4
  loop: start=0, step=1, limit=4
  $region2: #{tpu_custom_call.1} parent=0 // loop_pre_header
    _
  $region3: #{tpu_custom_call.1} parent=0 // loop_header
    %s9 = sphi 0, %s13
    %p10 = scmp.ge.s32.totalorder %s9, 4
    %s19 = sphi 0, %s21
    %s22 = sphi 0, %s19
    %s23 = sphi 0, %s22
    %s39 = sphi 0, %s23
    %s43 = sphi 0, %s43
    %s45 = sphi 0, %s43
    %s46 = sphi 0, %s45
    %s60 = sphi 0, %s46
    %s64 = sphi 0, %s64
    %s66 = sphi 0, %s64
    %s67 = sphi 0, %s66
    %s81 = sphi 0, %s67
    %s87 = sphi 0, %s89
    %s90 = sphi 0, %s87
    %s91 = sphi 0, %s90
    %s107 = sphi 0, %s91
  $region4: #{tpu_custom_call.1} parent=0 // loop_header_branch
    %12 = sbr.rel (%p10) target = $region8
  $region5: #{tpu_custom_call.1} parent=0 // loop_body
    %s14 = ssub.s32 %s9, 1
    %s15 = ssub.s32 %s9, 2
    %s16 = sadd.s32 %s9, 1
    %s17 = ssub.s32 %s9, %s16
    %p18 = scmp.eq.s32.totalorder %s17, 0
    %s20 = sadd.s32 %s19, 1
    %s21 = scalar_select %p18, %s19, %s20
    %p24 = pneg %p18
    %p25 = scmp.eq.s32.totalorder %s9, 1
    %p26 = por %p24, %p25
    %p27 = scmp.ne.s32.totalorder %s19, %s22
    %p28 = scmp.eq.s32.totalorder %s9, 0
    %p29 = por %p27, %p28
    %p30 = scmp.ne.s32.totalorder %s19, %s22
    %p31 = scmp.eq.s32.totalorder %s14, 1
    %p32 = por %p30, %p31
    %p33 = scmp.ne.s32.totalorder %s22, %s23
    %p34 = scmp.eq.s32.totalorder %s14, 0
    %p35 = por %p33, %p34
    %p36 = scmp.ne.s32.totalorder %s22, %s23
    %p37 = scmp.eq.s32.totalorder %s15, 1
    %p38 = por %p36, %p37
    %p40 = scmp.ne.s32.totalorder %s23, %s39
    %p41 = scmp.eq.s32.totalorder %s15, 0
    %p42 = por %p40, %p41
    %s44 = sadd.s32 %s43, 1
    %p47 = scmp.eq.s32.totalorder %s9, 1
    %p48 = scmp.ne.s32.totalorder %s43, %s45
    %p49 = scmp.eq.s32.totalorder %s9, 0
    %p50 = por %p48, %p49
    %p51 = scmp.ne.s32.totalorder %s43, %s45
    %p52 = scmp.eq.s32.totalorder %s14, 1
    %p53 = por %p51, %p52
    %p54 = scmp.ne.s32.totalorder %s45, %s46
    %p55 = scmp.eq.s32.totalorder %s14, 0
    %p56 = por %p54, %p55
    %p57 = scmp.ne.s32.totalorder %s45, %s46
    %p58 = scmp.eq.s32.totalorder %s15, 1
    %p59 = por %p57, %p58
    %p61 = scmp.ne.s32.totalorder %s46, %s60
    %p62 = scmp.eq.s32.totalorder %s15, 0
    %p63 = por %p61, %p62
    %s65 = sadd.s32 %s64, 1
    %p68 = scmp.eq.s32.totalorder %s9, 1
    %p69 = scmp.ne.s32.totalorder %s64, %s66
    %p70 = scmp.eq.s32.totalorder %s9, 0
    %p71 = por %p69, %p70
    %p72 = scmp.ne.s32.totalorder %s64, %s66
    %p73 = scmp.eq.s32.totalorder %s14, 1
    %p74 = por %p72, %p73
    %p75 = scmp.ne.s32.totalorder %s66, %s67
    %p76 = scmp.eq.s32.totalorder %s14, 0
    %p77 = por %p75, %p76
    %p78 = scmp.ne.s32.totalorder %s66, %s67
    %p79 = scmp.eq.s32.totalorder %s15, 1
    %p80 = por %p78, %p79
    %p82 = scmp.ne.s32.totalorder %s67, %s81
    %p83 = scmp.eq.s32.totalorder %s15, 0
    %p84 = por %p82, %p83
    %s85 = ssub.s32 %s9, %s16
    %p86 = scmp.eq.s32.totalorder %s85, 0
    %s88 = sadd.s32 %s87, 1
    %s89 = scalar_select %p86, %s87, %s88
    %p92 = pneg %p86
    %p93 = scmp.eq.s32.totalorder %s9, 1
    %p94 = por %p92, %p93
    %p95 = scmp.ne.s32.totalorder %s87, %s90
    %p96 = scmp.eq.s32.totalorder %s9, 0
    %p97 = por %p95, %p96
    %p98 = scmp.ne.s32.totalorder %s87, %s90
    %p99 = scmp.eq.s32.totalorder %s14, 1
    %p100 = por %p98, %p99
    %p101 = scmp.ne.s32.totalorder %s90, %s91
    %p102 = scmp.eq.s32.totalorder %s14, 0
    %p103 = por %p101, %p102
    %p104 = scmp.ne.s32.totalorder %s90, %s91
    %p105 = scmp.eq.s32.totalorder %s15, 1
    %p106 = por %p104, %p105
    %p108 = scmp.ne.s32.totalorder %s91, %s107
    %p109 = scmp.eq.s32.totalorder %s15, 0
    %p110 = por %p108, %p109
    %p111 = scmp.le.s32.totalorder 1, %s9
    %p112 = scmp.lt.s32.totalorder %s9, 3
    %p113 = pnand %p111, %p112
    %p114 = pneg %p113
    // Predicated region
    $region9: #{tpu_custom_call.1} parent=5 // pred_check
      _
    $region10: #{tpu_custom_call.1} parent=5 // pred_check_branch
      %116 = sbr.rel (%p113) target = $region12
    $region11: #{tpu_custom_call.1} parent=5 // pred_region
      %s117 = ssub.s32 %s9, 1
      // Predicated region
      $region13: #{tpu_custom_call.1} parent=11 // pred_check
        %p118 = pneg %p56
      $region14: #{tpu_custom_call.1} parent=11 // pred_check_branch
        %120 = sbr.rel (%p118) target = $region16
      $region15: #{tpu_custom_call.1} parent=11 // pred_region
        _
      $region16: #{tpu_custom_call.1} parent=11 // pred_fallthru
        _
      // Predicated region
      $region17: #{tpu_custom_call.1} parent=11 // pred_check
        %p121 = pneg %p77
      $region18: #{tpu_custom_call.1} parent=11 // pred_check_branch
        %123 = sbr.rel (%p121) target = $region20
      $region19: #{tpu_custom_call.1} parent=11 // pred_region
        _
      $region20: #{tpu_custom_call.1} parent=11 // pred_fallthru
        _
    $region12: #{tpu_custom_call.1} parent=5 // pred_fallthru
      _
    %p124 = scmp.lt.s32.totalorder %s9, 2
    // Predicated region
    $region21: #{tpu_custom_call.1} parent=5 // pred_check
      %p125 = pneg %p124
    $region22: #{tpu_custom_call.1} parent=5 // pred_check_branch
      %127 = sbr.rel (%p125) target = $region24
    $region23: #{tpu_custom_call.1} parent=5 // pred_region
      // Predicated region
      $region25: #{tpu_custom_call.1} parent=23 // pred_check
        %p128 = pneg %p29
      $region26: #{tpu_custom_call.1} parent=23 // pred_check_branch
        %130 = sbr.rel (%p128) target = $region28
      $region27: #{tpu_custom_call.1} parent=23 // pred_region
        %s131 = smul.u32 16, %s9
        %p132 = scmp.lt.s32.totalorder %s131, 31
        %s133 = scalar_select %p132, %s131, 31
        %s134 = smul.addr %s133, 8
        %s135 = scalar_lea.vmem %s0, %s134
        %s136 = smul.u32 16, %s9
      $region28: #{tpu_custom_call.1} parent=23 // pred_fallthru
        _
    $region24: #{tpu_custom_call.1} parent=5 // pred_fallthru
      _
    %p137 = scmp.le.s32.totalorder 1, %s9
    %p138 = scmp.lt.s32.totalorder %s9, 3
    %p139 = pnand %p137, %p138
    %p140 = pneg %p139
    // Predicated region
    $region29: #{tpu_custom_call.1} parent=5 // pred_check
      _
    $region30: #{tpu_custom_call.1} parent=5 // pred_check_branch
      %142 = sbr.rel (%p139) target = $region32
    $region31: #{tpu_custom_call.1} parent=5 // pred_region
      %s143 = ssub.s32 %s9, 1
      %s144 = smul.u32 16, %s14
      %p145 = scmp.lt.s32.totalorder %s144, 31
      %s146 = scalar_select %p145, %s144, 31
      %s147 = smul.addr %s146, 8
      %s148 = scalar_lea.vmem %s0, %s147
      %p149 = pneg %p35
      %p150 = pneg %p32
      %p151 = pneg %p56
      %p152 = pneg %p53
      %p153 = pneg %p77
      %p154 = pneg %p74
      %p155 = pneg %p103
      %p156 = pneg %p100
      %s157 = smul.u32 16, %s14
      %p158 = scmp.lt.s32.totalorder %s157, 31
      %s159 = scalar_select %p158, %s157, 31
      %s160 = smul.addr %s159, 8
      %s161 = scalar_lea.vmem %s3, %s160
      %s162 = smul.u32 16, %s14
      %p163 = scmp.lt.s32.totalorder %s162, 31
      %s164 = scalar_select %p163, %s162, 31
      %s165 = smul.addr %s164, 8
      %s166 = scalar_lea.vmem %s0, %s165
      %s167 = smul.u32 16, %s14
      %s168 = smul.u32 16, %s14
      %p169 = scmp.lt.s32.totalorder %s168, 31
      %s170 = scalar_select %p169, %s168, 31
      %s171 = smul.addr %s170, 8
      %s172 = scalar_lea.vmem %s3, %s171
      %s173 = smul.u32 16, %s14
      %v174 = vld [vmem:[%s166] sm:$0xff]
      %v175 = vld [vmem:[%s166 + $0x8] sm:$0xff]
      %v176 = vld [vmem:[%s166 + $0x10] sm:$0xff]
      %v177 = vld [vmem:[%s166 + $0x18] sm:$0xff]
      %v178 = vld [vmem:[%s166 + $0x20] sm:$0xff]
      %v179 = vld [vmem:[%s166 + $0x28] sm:$0xff]
      %v180 = vld [vmem:[%s166 + $0x30] sm:$0xff]
      %v181 = vld [vmem:[%s166 + $0x38] sm:$0xff]
      %v182 = vld [vmem:[%s166 + $0x40] sm:$0xff]
      %v183 = vld [vmem:[%s166 + $0x48] sm:$0xff]
      %v184 = vld [vmem:[%s166 + $0x50] sm:$0xff]
      %v185 = vld [vmem:[%s166 + $0x58] sm:$0xff]
      %v186 = vld [vmem:[%s166 + $0x60] sm:$0xff]
      %v187 = vld [vmem:[%s166 + $0x68] sm:$0xff]
      %v188 = vld [vmem:[%s166 + $0x70] sm:$0xff]
      %v189 = vld [vmem:[%s166 + $0x78] sm:$0xff]
      %v190 = vld [vmem:[%s1] sm:$0xff]
      %v191 = vld [vmem:[%s1 + $0x8] sm:$0xff]
      %v192 = vld [vmem:[%s1 + $0x10] sm:$0xff]
      %v193 = vld [vmem:[%s1 + $0x18] sm:$0xff]
      %v194 = vld [vmem:[%s2] sm:$0x1]
      %v196 = vperm.slane %v194, 0
      %vm198 = vcmask 261120
      %v200 = vsel %vm198, %v174, 0
      %v203 = vsel %vm198, %v175, 0
      %v206 = vsel %vm198, %v176, 0
      %v209 = vsel %vm198, %v177, 0
      %v212 = vsel %vm198, %v178, 0
      %v215 = vsel %vm198, %v179, 0
      %v218 = vsel %vm198, %v180, 0
      %v221 = vsel %vm198, %v181, 0
      %v224 = vsel %vm198, %v182, 0
      %v227 = vsel %vm198, %v183, 0
      %v230 = vsel %vm198, %v184, 0
      %v233 = vsel %vm198, %v185, 0
      %v236 = vsel %vm198, %v186, 0
      %v239 = vsel %vm198, %v187, 0
      %v242 = vsel %vm198, %v188, 0
      %v245 = vsel %vm198, %v189, 0
      %247 = vmatpush.msra.mxu0 0.0
      %248 = vmatpush.msra.mxu0 0.0
      %249 = vmatpush.msra.mxu0 0.0
      %250 = vmatpush.msra.mxu0 0.0
      %251 = vmatpush.msra.mxu0 0.0
      %252 = vmatpush.msra.mxu0 0.0
      %253 = vmatpush.msra.mxu0 0.0
      %254 = vmatpush.msra.mxu0 0.0
      %255 = vmatpush.msra.mxu0 0.0
      %256 = vmatpush.msra.mxu0 0.0
      %257 = vmatpush.msra.mxu0 0.0
      %258 = vmatpush.msra.mxu0 0.0
      %259 = vmatpush.msra.mxu0 %v193
      %260 = vmatpush.msra.mxu0 %v192
      %261 = vmatpush.msra.mxu0 %v191
      %262 = vmatpush.msra.mxu0 %v190
      %263 = vmatmul.f32.gmra.mxu0 %v200
      %v264 = vpop.f32.mrf.mxu0
      %v265 = vadd.f32 %v196, %v264
      %266 = vmatmul.f32.gmra.mxu0 %v203
      %v267 = vpop.f32.mrf.mxu0
      %v268 = vadd.f32 %v196, %v267
      %269 = vmatmul.f32.gmra.mxu0 %v206
      %v270 = vpop.f32.mrf.mxu0
      %v271 = vadd.f32 %v196, %v270
      %272 = vmatmul.f32.gmra.mxu0 %v209
      %v273 = vpop.f32.mrf.mxu0
      %v274 = vadd.f32 %v196, %v273
      %275 = vmatmul.f32.gmra.mxu0 %v212
      %v276 = vpop.f32.mrf.mxu0
      %v277 = vadd.f32 %v196, %v276
      %278 = vmatmul.f32.gmra.mxu0 %v215
      %v279 = vpop.f32.mrf.mxu0
      %v280 = vadd.f32 %v196, %v279
      %281 = vmatmul.f32.gmra.mxu0 %v218
      %v282 = vpop.f32.mrf.mxu0
      %v283 = vadd.f32 %v196, %v282
      %284 = vmatmul.f32.gmra.mxu0 %v221
      %v285 = vpop.f32.mrf.mxu0
      %v286 = vadd.f32 %v196, %v285
      %287 = vmatmul.f32.gmra.mxu0 %v224
      %v288 = vpop.f32.mrf.mxu0
      %v289 = vadd.f32 %v196, %v288
      %290 = vmatmul.f32.gmra.mxu0 %v227
      %v291 = vpop.f32.mrf.mxu0
      %v292 = vadd.f32 %v196, %v291
      %293 = vmatmul.f32.gmra.mxu0 %v230
      %v294 = vpop.f32.mrf.mxu0
      %v295 = vadd.f32 %v196, %v294
      %296 = vmatmul.f32.gmra.mxu0 %v233
      %v297 = vpop.f32.mrf.mxu0
      %v298 = vadd.f32 %v196, %v297
      %299 = vmatmul.f32.gmra.mxu0 %v236
      %v300 = vpop.f32.mrf.mxu0
      %v301 = vadd.f32 %v196, %v300
      %302 = vmatmul.f32.gmra.mxu0 %v239
      %v303 = vpop.f32.mrf.mxu0
      %v304 = vadd.f32 %v196, %v303
      %305 = vmatmul.f32.gmra.mxu0 %v242
      %v306 = vpop.f32.mrf.mxu0
      %v307 = vadd.f32 %v196, %v306
      %308 = vmatmul.f32.gmra.mxu0 %v245
      %v309 = vpop.f32.mrf.mxu0
      %v310 = vadd.f32 %v196, %v309
      %311 = vdwg.mxu0
      %312 = vmax.xlane.f32.xlu0 %v265
      %v313 = vpop.xlane.xlu0 %312
      %314 = vmax.xlane.f32.xlu0 %v268
      %v315 = vpop.xlane.xlu0 %314
      %316 = vmax.xlane.f32.xlu0 %v271
      %v317 = vpop.xlane.xlu0 %316
      %318 = vmax.xlane.f32.xlu0 %v274
      %v319 = vpop.xlane.xlu0 %318
      %320 = vmax.xlane.f32.xlu0 %v277
      %v321 = vpop.xlane.xlu0 %320
      %322 = vmax.xlane.f32.xlu0 %v280
      %v323 = vpop.xlane.xlu0 %322
      %324 = vmax.xlane.f32.xlu0 %v283
      %v325 = vpop.xlane.xlu0 %324
      %326 = vmax.xlane.f32.xlu0 %v286
      %v327 = vpop.xlane.xlu0 %326
      %328 = vmax.xlane.f32.xlu0 %v289
      %v329 = vpop.xlane.xlu0 %328
      %330 = vmax.xlane.f32.xlu0 %v292
      %v331 = vpop.xlane.xlu0 %330
      %332 = vmax.xlane.f32.xlu0 %v295
      %v333 = vpop.xlane.xlu0 %332
      %334 = vmax.xlane.f32.xlu0 %v298
      %v335 = vpop.xlane.xlu0 %334
      %336 = vmax.xlane.f32.xlu0 %v301
      %v337 = vpop.xlane.xlu0 %336
      %338 = vmax.xlane.f32.xlu0 %v304
      %v339 = vpop.xlane.xlu0 %338
      %340 = vmax.xlane.f32.xlu0 %v307
      %v341 = vpop.xlane.xlu0 %340
      %342 = vmax.xlane.f32.xlu0 %v310
      %v343 = vpop.xlane.xlu0 %342
      %v344 = vsub.f32 %v265, %v313
      %v345 = vsub.f32 %v268, %v315
      %v346 = vsub.f32 %v271, %v317
      %v347 = vsub.f32 %v274, %v319
      %v348 = vsub.f32 %v277, %v321
      %v349 = vsub.f32 %v280, %v323
      %v350 = vsub.f32 %v283, %v325
      %v351 = vsub.f32 %v286, %v327
      %v352 = vsub.f32 %v289, %v329
      %v353 = vsub.f32 %v292, %v331
      %v354 = vsub.f32 %v295, %v333
      %v355 = vsub.f32 %v298, %v335
      %v356 = vsub.f32 %v301, %v337
      %v357 = vsub.f32 %v304, %v339
      %v358 = vsub.f32 %v307, %v341
      %v359 = vsub.f32 %v310, %v343
      %v360 = vmul.f32 %v344, 1.442695
      %v361 = vpow.pop %v360
      %v362 = vmul.f32 %v345, 1.442695
      %v363 = vpow.pop %v362
      %v364 = vmul.f32 %v346, 1.442695
      %v365 = vpow.pop %v364
      %v366 = vmul.f32 %v347, 1.442695
      %v367 = vpow.pop %v366
      %v368 = vmul.f32 %v348, 1.442695
      %v369 = vpow.pop %v368
      %v370 = vmul.f32 %v349, 1.442695
      %v371 = vpow.pop %v370
      %v372 = vmul.f32 %v350, 1.442695
      %v373 = vpow.pop %v372
      %v374 = vmul.f32 %v351, 1.442695
      %v375 = vpow.pop %v374
      %v376 = vmul.f32 %v352, 1.442695
      %v377 = vpow.pop %v376
      %v378 = vmul.f32 %v353, 1.442695
      %v379 = vpow.pop %v378
      %v380 = vmul.f32 %v354, 1.442695
      %v381 = vpow.pop %v380
      %v382 = vmul.f32 %v355, 1.442695
      %v383 = vpow.pop %v382
      %v384 = vmul.f32 %v356, 1.442695
      %v385 = vpow.pop %v384
      %v386 = vmul.f32 %v357, 1.442695
      %v387 = vpow.pop %v386
      %v388 = vmul.f32 %v358, 1.442695
      %v389 = vpow.pop %v388
      %v390 = vmul.f32 %v359, 1.442695
      %v391 = vpow.pop %v390
      %392 = vadd.xlane.f32.xlu0 %v361
      %v393 = vpop.xlane.xlu0 %392
      %394 = vadd.xlane.f32.xlu0 %v363
      %v395 = vpop.xlane.xlu0 %394
      %396 = vadd.xlane.f32.xlu0 %v365
      %v397 = vpop.xlane.xlu0 %396
      %398 = vadd.xlane.f32.xlu0 %v367
      %v399 = vpop.xlane.xlu0 %398
      %400 = vadd.xlane.f32.xlu0 %v369
      %v401 = vpop.xlane.xlu0 %400
      %402 = vadd.xlane.f32.xlu0 %v371
      %v403 = vpop.xlane.xlu0 %402
      %404 = vadd.xlane.f32.xlu0 %v373
      %v405 = vpop.xlane.xlu0 %404
      %406 = vadd.xlane.f32.xlu0 %v375
      %v407 = vpop.xlane.xlu0 %406
      %408 = vadd.xlane.f32.xlu0 %v377
      %v409 = vpop.xlane.xlu0 %408
      %410 = vadd.xlane.f32.xlu0 %v379
      %v411 = vpop.xlane.xlu0 %410
      %412 = vadd.xlane.f32.xlu0 %v381
      %v413 = vpop.xlane.xlu0 %412
      %414 = vadd.xlane.f32.xlu0 %v383
      %v415 = vpop.xlane.xlu0 %414
      %416 = vadd.xlane.f32.xlu0 %v385
      %v417 = vpop.xlane.xlu0 %416
      %418 = vadd.xlane.f32.xlu0 %v387
      %v419 = vpop.xlane.xlu0 %418
      %420 = vadd.xlane.f32.xlu0 %v389
      %v421 = vpop.xlane.xlu0 %420
      %422 = vadd.xlane.f32.xlu0 %v391
      %v423 = vpop.xlane.xlu0 %422
      %v424 = vrcp.pop %v393
      %v425 = vmul.f32 %v393, %v424
      %v426 = vsub.f32 1.0, %v425
      %v427 = vmul.f32 %v424, %v426
      %v428 = vadd.f32 %v424, %v427
      %vm429 = vweird.f32 %v393
      %vm430 = vweird.f32 %v424
      %vm431 = vmor %vm429, %vm430
      %v432 = vsel %vm431, %v424, %v428
      %v433 = vand.u32 2147483647, %v393
      %vm434 = vcmp.eq.f32.partialorder %v433, 8.507059e+37
      %v435 = vand.u32 %v393, 2147483648
      %v436 = vor.u32 1.1754944e-38, %v435
      %v437 = vsel %vm434, %v436, %v432
      %v438 = vmul.f32 %v361, %v437
      %v439 = vrcp.pop %v395
      %v440 = vmul.f32 %v395, %v439
      %v441 = vsub.f32 1.0, %v440
      %v442 = vmul.f32 %v439, %v441
      %v443 = vadd.f32 %v439, %v442
      %vm444 = vweird.f32 %v395
      %vm445 = vweird.f32 %v439
      %vm446 = vmor %vm444, %vm445
      %v447 = vsel %vm446, %v439, %v443
      %v448 = vand.u32 2147483647, %v395
      %vm449 = vcmp.eq.f32.partialorder %v448, 8.507059e+37
      %v450 = vand.u32 %v395, 2147483648
      %v451 = vor.u32 1.1754944e-38, %v450
      %v452 = vsel %vm449, %v451, %v447
      %v453 = vmul.f32 %v363, %v452
      %v454 = vrcp.pop %v397
      %v455 = vmul.f32 %v397, %v454
      %v456 = vsub.f32 1.0, %v455
      %v457 = vmul.f32 %v454, %v456
      %v458 = vadd.f32 %v454, %v457
      %vm459 = vweird.f32 %v397
      %vm460 = vweird.f32 %v454
      %vm461 = vmor %vm459, %vm460
      %v462 = vsel %vm461, %v454, %v458
      %v463 = vand.u32 2147483647, %v397
      %vm464 = vcmp.eq.f32.partialorder %v463, 8.507059e+37
      %v465 = vand.u32 %v397, 2147483648
      %v466 = vor.u32 1.1754944e-38, %v465
      %v467 = vsel %vm464, %v466, %v462
      %v468 = vmul.f32 %v365, %v467
      %v469 = vrcp.pop %v399
      %v470 = vmul.f32 %v399, %v469
      %v471 = vsub.f32 1.0, %v470
      %v472 = vmul.f32 %v469, %v471
      %v473 = vadd.f32 %v469, %v472
      %vm474 = vweird.f32 %v399
      %vm475 = vweird.f32 %v469
      %vm476 = vmor %vm474, %vm475
      %v477 = vsel %vm476, %v469, %v473
      %v478 = vand.u32 2147483647, %v399
      %vm479 = vcmp.eq.f32.partialorder %v478, 8.507059e+37
      %v480 = vand.u32 %v399, 2147483648
      %v481 = vor.u32 1.1754944e-38, %v480
      %v482 = vsel %vm479, %v481, %v477
      %v483 = vmul.f32 %v367, %v482
      %v484 = vrcp.pop %v401
      %v485 = vmul.f32 %v401, %v484
      %v486 = vsub.f32 1.0, %v485
      %v487 = vmul.f32 %v484, %v486
      %v488 = vadd.f32 %v484, %v487
      %vm489 = vweird.f32 %v401
      %vm490 = vweird.f32 %v484
      %vm491 = vmor %vm489, %vm490
      %v492 = vsel %vm491, %v484, %v488
      %v493 = vand.u32 2147483647, %v401
      %vm494 = vcmp.eq.f32.partialorder %v493, 8.507059e+37
      %v495 = vand.u32 %v401, 2147483648
      %v496 = vor.u32 1.1754944e-38, %v495
      %v497 = vsel %vm494, %v496, %v492
      %v498 = vmul.f32 %v369, %v497
      %v499 = vrcp.pop %v403
      %v500 = vmul.f32 %v403, %v499
      %v501 = vsub.f32 1.0, %v500
      %v502 = vmul.f32 %v499, %v501
      %v503 = vadd.f32 %v499, %v502
      %vm504 = vweird.f32 %v403
      %vm505 = vweird.f32 %v499
      %vm506 = vmor %vm504, %vm505
      %v507 = vsel %vm506, %v499, %v503
      %v508 = vand.u32 2147483647, %v403
      %vm509 = vcmp.eq.f32.partialorder %v508, 8.507059e+37
      %v510 = vand.u32 %v403, 2147483648
      %v511 = vor.u32 1.1754944e-38, %v510
      %v512 = vsel %vm509, %v511, %v507
      %v513 = vmul.f32 %v371, %v512
      %v514 = vrcp.pop %v405
      %v515 = vmul.f32 %v405, %v514
      %v516 = vsub.f32 1.0, %v515
      %v517 = vmul.f32 %v514, %v516
      %v518 = vadd.f32 %v514, %v517
      %vm519 = vweird.f32 %v405
      %vm520 = vweird.f32 %v514
      %vm521 = vmor %vm519, %vm520
      %v522 = vsel %vm521, %v514, %v518
      %v523 = vand.u32 2147483647, %v405
      %vm524 = vcmp.eq.f32.partialorder %v523, 8.507059e+37
      %v525 = vand.u32 %v405, 2147483648
      %v526 = vor.u32 1.1754944e-38, %v525
      %v527 = vsel %vm524, %v526, %v522
      %v528 = vmul.f32 %v373, %v527
      %v529 = vrcp.pop %v407
      %v530 = vmul.f32 %v407, %v529
      %v531 = vsub.f32 1.0, %v530
      %v532 = vmul.f32 %v529, %v531
      %v533 = vadd.f32 %v529, %v532
      %vm534 = vweird.f32 %v407
      %vm535 = vweird.f32 %v529
      %vm536 = vmor %vm534, %vm535
      %v537 = vsel %vm536, %v529, %v533
      %v538 = vand.u32 2147483647, %v407
      %vm539 = vcmp.eq.f32.partialorder %v538, 8.507059e+37
      %v540 = vand.u32 %v407, 2147483648
      %v541 = vor.u32 1.1754944e-38, %v540
      %v542 = vsel %vm539, %v541, %v537
      %v543 = vmul.f32 %v375, %v542
      %v544 = vrcp.pop %v409
      %v545 = vmul.f32 %v409, %v544
      %v546 = vsub.f32 1.0, %v545
      %v547 = vmul.f32 %v544, %v546
      %v548 = vadd.f32 %v544, %v547
      %vm549 = vweird.f32 %v409
      %vm550 = vweird.f32 %v544
      %vm551 = vmor %vm549, %vm550
      %v552 = vsel %vm551, %v544, %v548
      %v553 = vand.u32 2147483647, %v409
      %vm554 = vcmp.eq.f32.partialorder %v553, 8.507059e+37
      %v555 = vand.u32 %v409, 2147483648
      %v556 = vor.u32 1.1754944e-38, %v555
      %v557 = vsel %vm554, %v556, %v552
      %v558 = vmul.f32 %v377, %v557
      %v559 = vrcp.pop %v411
      %v560 = vmul.f32 %v411, %v559
      %v561 = vsub.f32 1.0, %v560
      %v562 = vmul.f32 %v559, %v561
      %v563 = vadd.f32 %v559, %v562
      %vm564 = vweird.f32 %v411
      %vm565 = vweird.f32 %v559
      %vm566 = vmor %vm564, %vm565
      %v567 = vsel %vm566, %v559, %v563
      %v568 = vand.u32 2147483647, %v411
      %vm569 = vcmp.eq.f32.partialorder %v568, 8.507059e+37
      %v570 = vand.u32 %v411, 2147483648
      %v571 = vor.u32 1.1754944e-38, %v570
      %v572 = vsel %vm569, %v571, %v567
      %v573 = vmul.f32 %v379, %v572
      %v574 = vrcp.pop %v413
      %v575 = vmul.f32 %v413, %v574
      %v576 = vsub.f32 1.0, %v575
      %v577 = vmul.f32 %v574, %v576
      %v578 = vadd.f32 %v574, %v577
      %vm579 = vweird.f32 %v413
      %vm580 = vweird.f32 %v574
      %vm581 = vmor %vm579, %vm580
      %v582 = vsel %vm581, %v574, %v578
      %v583 = vand.u32 2147483647, %v413
      %vm584 = vcmp.eq.f32.partialorder %v583, 8.507059e+37
      %v585 = vand.u32 %v413, 2147483648
      %v586 = vor.u32 1.1754944e-38, %v585
      %v587 = vsel %vm584, %v586, %v582
      %v588 = vmul.f32 %v381, %v587
      %v589 = vrcp.pop %v415
      %v590 = vmul.f32 %v415, %v589
      %v591 = vsub.f32 1.0, %v590
      %v592 = vmul.f32 %v589, %v591
      %v593 = vadd.f32 %v589, %v592
      %vm594 = vweird.f32 %v415
      %vm595 = vweird.f32 %v589
      %vm596 = vmor %vm594, %vm595
      %v597 = vsel %vm596, %v589, %v593
      %v598 = vand.u32 2147483647, %v415
      %vm599 = vcmp.eq.f32.partialorder %v598, 8.507059e+37
      %v600 = vand.u32 %v415, 2147483648
      %v601 = vor.u32 1.1754944e-38, %v600
      %v602 = vsel %vm599, %v601, %v597
      %v603 = vmul.f32 %v383, %v602
      %v604 = vrcp.pop %v417
      %v605 = vmul.f32 %v417, %v604
      %v606 = vsub.f32 1.0, %v605
      %v607 = vmul.f32 %v604, %v606
      %v608 = vadd.f32 %v604, %v607
      %vm609 = vweird.f32 %v417
      %vm610 = vweird.f32 %v604
      %vm611 = vmor %vm609, %vm610
      %v612 = vsel %vm611, %v604, %v608
      %v613 = vand.u32 2147483647, %v417
      %vm614 = vcmp.eq.f32.partialorder %v613, 8.507059e+37
      %v615 = vand.u32 %v417, 2147483648
      %v616 = vor.u32 1.1754944e-38, %v615
      %v617 = vsel %vm614, %v616, %v612
      %v618 = vmul.f32 %v385, %v617
      %v619 = vrcp.pop %v419
      %v620 = vmul.f32 %v419, %v619
      %v621 = vsub.f32 1.0, %v620
      %v622 = vmul.f32 %v619, %v621
      %v623 = vadd.f32 %v619, %v622
      %vm624 = vweird.f32 %v419
      %vm625 = vweird.f32 %v619
      %vm626 = vmor %vm624, %vm625
      %v627 = vsel %vm626, %v619, %v623
      %v628 = vand.u32 2147483647, %v419
      %vm629 = vcmp.eq.f32.partialorder %v628, 8.507059e+37
      %v630 = vand.u32 %v419, 2147483648
      %v631 = vor.u32 1.1754944e-38, %v630
      %v632 = vsel %vm629, %v631, %v627
      %v633 = vmul.f32 %v387, %v632
      %v634 = vrcp.pop %v421
      %v635 = vmul.f32 %v421, %v634
      %v636 = vsub.f32 1.0, %v635
      %v637 = vmul.f32 %v634, %v636
      %v638 = vadd.f32 %v634, %v637
      %vm639 = vweird.f32 %v421
      %vm640 = vweird.f32 %v634
      %vm641 = vmor %vm639, %vm640
      %v642 = vsel %vm641, %v634, %v638
      %v643 = vand.u32 2147483647, %v421
      %vm644 = vcmp.eq.f32.partialorder %v643, 8.507059e+37
      %v645 = vand.u32 %v421, 2147483648
      %v646 = vor.u32 1.1754944e-38, %v645
      %v647 = vsel %vm644, %v646, %v642
      %v648 = vmul.f32 %v389, %v647
      %v649 = vrcp.pop %v423
      %v650 = vmul.f32 %v423, %v649
      %v651 = vsub.f32 1.0, %v650
      %v652 = vmul.f32 %v649, %v651
      %v653 = vadd.f32 %v649, %v652
      %vm654 = vweird.f32 %v423
      %vm655 = vweird.f32 %v649
      %vm656 = vmor %vm654, %vm655
      %v657 = vsel %vm656, %v649, %v653
      %v658 = vand.u32 2147483647, %v423
      %vm659 = vcmp.eq.f32.partialorder %v658, 8.507059e+37
      %v660 = vand.u32 %v423, 2147483648
      %v661 = vor.u32 1.1754944e-38, %v660
      %v662 = vsel %vm659, %v661, %v657
      %v663 = vmul.f32 %v391, %v662
      %vm664 = vcmask 130048
      %665 = vst.msk [vmem:[%s172] sm:$0xff] %vm664, %v438
      %666 = vst.msk [vmem:[%s172 + $0x8] sm:$0xff] %vm664, %v453
      %667 = vst.msk [vmem:[%s172 + $0x10] sm:$0xff] %vm664, %v468
      %668 = vst.msk [vmem:[%s172 + $0x18] sm:$0xff] %vm664, %v483
      %669 = vst.msk [vmem:[%s172 + $0x20] sm:$0xff] %vm664, %v498
      %670 = vst.msk [vmem:[%s172 + $0x28] sm:$0xff] %vm664, %v513
      %671 = vst.msk [vmem:[%s172 + $0x30] sm:$0xff] %vm664, %v528
      %672 = vst.msk [vmem:[%s172 + $0x38] sm:$0xff] %vm664, %v543
      %673 = vst.msk [vmem:[%s172 + $0x40] sm:$0xff] %vm664, %v558
      %674 = vst.msk [vmem:[%s172 + $0x48] sm:$0xff] %vm664, %v573
      %675 = vst.msk [vmem:[%s172 + $0x50] sm:$0xff] %vm664, %v588
      %676 = vst.msk [vmem:[%s172 + $0x58] sm:$0xff] %vm664, %v603
      %677 = vst.msk [vmem:[%s172 + $0x60] sm:$0xff] %vm664, %v618
      %678 = vst.msk [vmem:[%s172 + $0x68] sm:$0xff] %vm664, %v633
      %679 = vst.msk [vmem:[%s172 + $0x70] sm:$0xff] %vm664, %v648
      %680 = vst.msk [vmem:[%s172 + $0x78] sm:$0xff] %vm664, %v663
      %s681 = smul.u32 16, %s14
      %p682 = scmp.lt.s32.totalorder %s681, 31
      %s683 = scalar_select %p682, %s681, 31
      %s684 = smul.addr %s683, 8
      %s685 = scalar_lea.vmem %s3, %s684
      // Predicated region
      $region33: #{tpu_custom_call.1} parent=31 // pred_check
        %p686 = pneg %p100
      $region34: #{tpu_custom_call.1} parent=31 // pred_check_branch
        %688 = sbr.rel (%p686) target = $region36
      $region35: #{tpu_custom_call.1} parent=31 // pred_region
        %s689 = smul.u32 16, %s14
      $region36: #{tpu_custom_call.1} parent=31 // pred_fallthru
        _
    $region32: #{tpu_custom_call.1} parent=5 // pred_fallthru
      _
    %p690 = scmp.le.s32.totalorder 2, %s9
    // Predicated region
    $region37: #{tpu_custom_call.1} parent=5 // pred_check
      %p691 = pneg %p690
    $region38: #{tpu_custom_call.1} parent=5 // pred_check_branch
      %693 = sbr.rel (%p691) target = $region40
    $region39: #{tpu_custom_call.1} parent=5 // pred_region
      %s694 = ssub.s32 %s9, 2
      // Predicated region
      $region41: #{tpu_custom_call.1} parent=39 // pred_check
        %p695 = pneg %p106
      $region42: #{tpu_custom_call.1} parent=39 // pred_check_branch
        %697 = sbr.rel (%p695) target = $region44
      $region43: #{tpu_custom_call.1} parent=39 // pred_region
        %s698 = smul.u32 16, %s15
        %p699 = scmp.lt.s32.totalorder %s698, 31
        %s700 = scalar_select %p699, %s698, 31
        %s701 = smul.addr %s700, 8
        %s702 = scalar_lea.vmem %s3, %s701
      $region44: #{tpu_custom_call.1} parent=39 // pred_fallthru
        _
    $region40: #{tpu_custom_call.1} parent=5 // pred_fallthru
      _
  $region6: #{tpu_custom_call.1} parent=0 // loop_footer
    %s13 = sadd.s32 1, %s9
  $region7: #{tpu_custom_call.1} parent=0 // loop_footer_branch
    %8 = sbr.rel target = $region3
  $region8: #{tpu_custom_call.1} parent=0 // loop_exit
    _

</llo_original>
